<compile_context>
chip_gen: v5e
topology: v5e:2x2
jax: 0.10.0
libtpu: 0.0.40
codegen_flags: <defaults>
</compile_context>

<pallas_src>
import functools

import jax
import jax.numpy as jnp
from jax import lax
from jax.experimental import pallas as pl
from jax.experimental.pallas import tpu as pltpu


def _inception_kernel(x_ref, w_ref, o_ref, *, k_max, L, batch_tile):
    """x_ref: (TB, C_in, L + 2*pad_max) circularly-halo'd input block.
       w_ref: (C_out, k_max * C_in) combined weight (average folded in).
       o_ref: (TB, C_out, L)."""
    w = w_ref[...]
    for tb in range(batch_tile):
        xh = x_ref[tb]                                   # (C_in, L + 2*pad_max)
        # Shift s = s_idx - pad_max  <=>  static contiguous slice of the halo.
        taps = [xh[:, s_idx:s_idx + L] for s_idx in range(k_max)]
        stack = jnp.concatenate(taps, axis=0) if k_max > 1 else taps[0]
        # Single fused MXU matmul with fp32 accumulation.
        y = jnp.dot(w, stack, preferred_element_type=jnp.float32)
        o_ref[tb] = y.astype(o_ref.dtype)


def _build_combined_weight(weights, kernel_list, compute_dtype):
    """Fold the parallel convs (and the 1/len average) into one (C_out, k_max*C_in)."""
    C_out, C_in, _ = weights[0].shape
    k_max = max(kernel_list)
    pad_max = (k_max - 1) // 2
    inv_n = 1.0 / len(kernel_list)
    blocks = []
    for s_idx in range(k_max):
        s = s_idx - pad_max                              # spatial shift of this tap
        acc = jnp.zeros((C_out, C_in), jnp.float32)
        for w, k in zip(weights, kernel_list):
            j = s + (k - 1) // 2
            if 0 <= j < k:
                acc = acc + w[:, :, j].astype(jnp.float32)
        blocks.append(acc * inv_n)
    return jnp.concatenate(blocks, axis=1).astype(compute_dtype)


def inception_block(x, weights, kernel_list, *, batch_tile=None,
                    compute_dtype=jnp.bfloat16):
    """x: (N, C_in, L); weights[i]: (C_out, C_in, kernel_list[i]).
    Returns (N, C_out, L) in x.dtype."""
    if any(k % 2 == 0 for k in kernel_list):
        raise ValueError("only odd kernel sizes are supported "
                         "(symmetric 'same' circular padding)")

    N, C_in, L = x.shape
    C_out = weights[0].shape[0]
    k_max = max(kernel_list)
    pad_max = (k_max - 1) // 2

    if batch_tile is None:
        batch_tile = min(N, 8)
    n_blocks = pl.cdiv(N, batch_tile)
    N_pad = n_blocks * batch_tile

    # One-time circular halo: x_halo[..., u] = x[..., (u - pad_max) % L].
    if pad_max > 0:
        x_halo = jnp.concatenate([x[..., L - pad_max:], x, x[..., :pad_max]],
                                 axis=-1)
    else:
        x_halo = x
    if N_pad != N:
        x_halo = jnp.pad(x_halo, ((0, N_pad - N), (0, 0), (0, 0)))
    x_halo = x_halo.astype(compute_dtype)

    w_comb = _build_combined_weight(weights, kernel_list, compute_dtype)

    kernel = functools.partial(_inception_kernel, k_max=k_max, L=L,
                               batch_tile=batch_tile)
    L_halo = L + 2 * pad_max

    out = pl.pallas_call(
        kernel,
        out_shape=jax.ShapeDtypeStruct((N_pad, C_out, L), x.dtype),
        grid_spec=pltpu.PrefetchScalarGridSpec(
            num_scalar_prefetch=0,
            grid=(n_blocks,),
            in_specs=[
                pl.BlockSpec((batch_tile, C_in, L_halo), lambda b: (b, 0, 0)),
                pl.BlockSpec((C_out, k_max * C_in), lambda b: (0, 0)),
            ],
            out_specs=pl.BlockSpec((batch_tile, C_out, L), lambda b: (b, 0, 0)),
        ),
        compiler_params=pltpu.CompilerParams(
            dimension_semantics=("parallel",)),
    )(x_halo, w_comb)
    return out[:N]


def _reference(x, weights, kernel_list):
    """Pure-JAX reference using circular padding + conv (matches PyTorch)."""
    outs = []
    dn = lax.conv_dimension_numbers(x.shape, weights[0].shape,
                                    ('NCH', 'OIH', 'NCH'))
    for w, k in zip(weights, kernel_list):
        pad = (k - 1) // 2
        xp = jnp.pad(x, ((0, 0), (0, 0), (pad, pad)), mode='wrap') if pad > 0 else x
        y = lax.conv_general_dilated(xp, w, window_strides=(1,),
                                     padding='VALID', dimension_numbers=dn)
        outs.append(y)
    return jnp.mean(jnp.stack(outs, axis=-1), axis=-1)


def make_weights(key, in_channels, out_channels, kernel_list):
    """Deterministic kaiming_normal_(mode='fan_out', nonlinearity='relu') init."""
    weights = []
    for k in kernel_list:
        key, sub = jax.random.split(key)
        fan_out = out_channels * k
        std = (2.0 / fan_out) ** 0.5
        weights.append(std * jax.random.normal(
            sub, (out_channels, in_channels, k), dtype=jnp.float32))
    return weights


if __name__ == "__main__":
    kernel_list = [1, 3, 5]
    N, C_in, C_out, L = 4, 4, 8, 16

    key = jax.random.PRNGKey(0)
    kx, kw = jax.random.split(key)
    x = jax.random.normal(kx, (N, C_in, L), dtype=jnp.float32)
    weights = make_weights(kw, C_in, C_out, kernel_list)

    ref = _reference(x, weights, kernel_list)

    # fp32 compute path: must match the pure-JAX reference tightly.
    out_f32 = jax.block_until_ready(
        inception_block(x, weights, kernel_list, batch_tile=2,
                        compute_dtype=jnp.float32))
    assert out_f32.shape == (N, C_out, L)
    assert jnp.allclose(out_f32, ref, atol=1e-5, rtol=1e-5), "fp32 mismatch vs reference"

    # bf16 compute path (fp32 accumulation on the MXU): loose tolerance vs fp32 ref.
    out_bf16 = jax.block_until_ready(
        inception_block(x, weights, kernel_list, batch_tile=2,
                        compute_dtype=jnp.bfloat16))
    assert out_bf16.shape == (N, C_out, L)
    assert jnp.allclose(out_bf16, ref, atol=5e-2, rtol=5e-2), "bf16 mismatch vs reference"

    print("KERNEL_OK")
</pallas_src>

<mosaic_0001>
module attributes {stable_mosaic.version = 11 : i64} {
  func.func @_inception_kernel(%arg0: i32, %arg1: memref<2x4x20xf32, #tpu.memory_space<vmem>>, %arg2: memref<8x20xf32, #tpu.memory_space<vmem>>, %arg3: memref<2x8x16xf32, #tpu.memory_space<vmem>>) attributes {dimension_semantics = [#tpu.dimension_semantics<parallel>], iteration_bounds = array<i64: 2>, scalar_prefetch = 0 : i64, scratch_operands = 0 : i64, tpu.core_type = #tpu.core_type<tc>, window_params = [{transform_indices = @transform_0, window_bounds = array<i64: 2, 4, 20>}, {pipeline_mode = #tpu.pipeline_mode<synchronous>, transform_indices = @transform_1, window_bounds = array<i64: 8, 20>}, {transform_indices = @transform_2, window_bounds = array<i64: 2, 8, 16>}]} {
    %c0 = arith.constant 0 : index
    %c0_0 = arith.constant 0 : index
    %0 = vector.load %arg2[%c0, %c0_0] : memref<8x20xf32, #tpu.memory_space<vmem>>, vector<8x20xf32>
    %c0_1 = arith.constant 0 : index
    %c0_2 = arith.constant 0 : index
    %c0_3 = arith.constant 0 : index
    %1 = vector.load %arg1[%c0_1, %c0_2, %c0_3] : memref<2x4x20xf32, #tpu.memory_space<vmem>>, vector<1x4x20xf32>
    %2 = vector.shape_cast %1 : vector<1x4x20xf32> to vector<4x20xf32>
    %3 = vector.extract_strided_slice %2 {offsets = [0, 0], sizes = [4, 16], strides = [1, 1]} : vector<4x20xf32> to vector<4x16xf32>
    %4 = vector.extract_strided_slice %2 {offsets = [0, 1], sizes = [4, 16], strides = [1, 1]} : vector<4x20xf32> to vector<4x16xf32>
    %5 = vector.extract_strided_slice %2 {offsets = [0, 2], sizes = [4, 16], strides = [1, 1]} : vector<4x20xf32> to vector<4x16xf32>
    %6 = vector.extract_strided_slice %2 {offsets = [0, 3], sizes = [4, 16], strides = [1, 1]} : vector<4x20xf32> to vector<4x16xf32>
    %7 = vector.extract_strided_slice %2 {offsets = [0, 4], sizes = [4, 16], strides = [1, 1]} : vector<4x20xf32> to vector<4x16xf32>
    %8 = tpu.concatenate %3, %4, %5, %6, %7 in 0 : vector<4x16xf32>, vector<4x16xf32>, vector<4x16xf32>, vector<4x16xf32>, vector<4x16xf32> -> vector<20x16xf32>
    %cst = arith.constant dense<0.000000e+00> : vector<8x16xf32>
    %9 = tpu.matmul %0, %8, %cst {dimension_numbers = #tpu.dot_dimension_numbers<[1], [0], [0], [1], [0, 0, 1, 1], [], []>} : vector<8x20xf32>, vector<20x16xf32>, vector<8x16xf32> -> vector<8x16xf32>
    %c0_4 = arith.constant 0 : index
    %c0_5 = arith.constant 0 : index
    %c0_6 = arith.constant 0 : index
    %10 = vector.load %arg3[%c0_4, %c0_5, %c0_6] : memref<2x8x16xf32, #tpu.memory_space<vmem>>, vector<1x8x16xf32>
    %11 = vector.shape_cast %10 : vector<1x8x16xf32> to vector<8x16xf32>
    %12 = vector.shape_cast %9 : vector<8x16xf32> to vector<1x8x16xf32>
    tpu.vector_store %arg3[%c0_4, %c0_5, %c0_6], %12 {strides = array<i32>} : memref<2x8x16xf32, #tpu.memory_space<vmem>>, vector<1x8x16xf32>,
    %c1 = arith.constant 1 : index
    %c0_7 = arith.constant 0 : index
    %c0_8 = arith.constant 0 : index
    %13 = vector.load %arg1[%c1, %c0_7, %c0_8] : memref<2x4x20xf32, #tpu.memory_space<vmem>>, vector<1x4x20xf32>
    %14 = vector.shape_cast %13 : vector<1x4x20xf32> to vector<4x20xf32>
    %15 = vector.extract_strided_slice %14 {offsets = [0, 0], sizes = [4, 16], strides = [1, 1]} : vector<4x20xf32> to vector<4x16xf32>
    %16 = vector.extract_strided_slice %14 {offsets = [0, 1], sizes = [4, 16], strides = [1, 1]} : vector<4x20xf32> to vector<4x16xf32>
    %17 = vector.extract_strided_slice %14 {offsets = [0, 2], sizes = [4, 16], strides = [1, 1]} : vector<4x20xf32> to vector<4x16xf32>
    %18 = vector.extract_strided_slice %14 {offsets = [0, 3], sizes = [4, 16], strides = [1, 1]} : vector<4x20xf32> to vector<4x16xf32>
    %19 = vector.extract_strided_slice %14 {offsets = [0, 4], sizes = [4, 16], strides = [1, 1]} : vector<4x20xf32> to vector<4x16xf32>
    %20 = tpu.concatenate %15, %16, %17, %18, %19 in 0 : vector<4x16xf32>, vector<4x16xf32>, vector<4x16xf32>, vector<4x16xf32>, vector<4x16xf32> -> vector<20x16xf32>
    %cst_9 = arith.constant dense<0.000000e+00> : vector<8x16xf32>
    %21 = tpu.matmul %0, %20, %cst_9 {dimension_numbers = #tpu.dot_dimension_numbers<[1], [0], [0], [1], [0, 0, 1, 1], [], []>} : vector<8x20xf32>, vector<20x16xf32>, vector<8x16xf32> -> vector<8x16xf32>
    %c1_10 = arith.constant 1 : index
    %c0_11 = arith.constant 0 : index
    %c0_12 = arith.constant 0 : index
    %22 = vector.load %arg3[%c1_10, %c0_11, %c0_12] : memref<2x8x16xf32, #tpu.memory_space<vmem>>, vector<1x8x16xf32>
    %23 = vector.shape_cast %22 : vector<1x8x16xf32> to vector<8x16xf32>
    %24 = vector.shape_cast %21 : vector<8x16xf32> to vector<1x8x16xf32>
    tpu.vector_store %arg3[%c1_10, %c0_11, %c0_12], %24 {strides = array<i32>} : memref<2x8x16xf32, #tpu.memory_space<vmem>>, vector<1x8x16xf32>,
    return
  }
  func.func @transform_0(%arg0: i32) -> (i32, i32, i32) {
    %c0_i32 = arith.constant 0 : i32
    %c0_i32_0 = arith.constant 0 : i32
    %c0_i32_1 = arith.constant 0 : i32
    return %arg0, %c0_i32, %c0_i32_0 : i32, i32, i32
  }
  func.func @transform_1(%arg0: i32) -> (i32, i32) {
    %c0_i32 = arith.constant 0 : i32
    %c0_i32_0 = arith.constant 0 : i32
    %c0_i32_1 = arith.constant 0 : i32
    return %c0_i32, %c0_i32_0 : i32, i32
  }
  func.func @transform_2(%arg0: i32) -> (i32, i32, i32) {
    %c0_i32 = arith.constant 0 : i32
    %c0_i32_0 = arith.constant 0 : i32
    %c0_i32_1 = arith.constant 0 : i32
    return %arg0, %c0_i32, %c0_i32_0 : i32, i32, i32
  }
}

</mosaic_0001>

<llo_original>
// kernel: tpu_custom_call.1
$region0: #{tpu_custom_call.1}
  #allocation0 [shape = 'u32[]', space=smem, size = 0x4, offset = 0x4, fixed_abs, tag = 'smem constant byte address 0x4 - core index']
  #allocation1 [shape = 'u32[72,128]{1,0:T(1,128)}', space=vmem, size = 0x9000, scoped, tag = 'internal scratch']
  %s0 = inlined_call_operand.hbm [shape: f32[4,4,20], index: 0, kind: input, shape index: {}]
  %s1 = inlined_call_operand.hbm [shape: f32[8,20], index: 1, kind: input, shape index: {}]
  %s2 = inlined_call_operand.hbm [shape: f32[4,8,16], index: 2, kind: output, shape index: {}]
  %s3 = sld [smem:[#allocation0]]
  $region49: #{tpu_custom_call.1} parent=0
    _
  %s5 = ssub.s32 1, %s3
  %s6 = scalar_select 0, %s5, %s3
  $region1: #{tpu_custom_call.1} parent=0
    #allocation2 [shape = 'u8[8192]{0}', space=vmem, size = 0x2000, scoped, tag = 'input window, operand 0']
    #allocation3 [shape = 's32[2]{0}', space=sflag, size = 0x8, scoped, tag = 'scoped memory for tpu_custom_call.1']
    #allocation4 [shape = 's32[2]{0}', space=sflag, size = 0x8, scoped, tag = 'scoped memory for tpu_custom_call.1']
    #allocation5 [shape = 'u8[4096]{0}', space=vmem, size = 0x1000, scoped, tag = 'input window, operand 1, single buffered']
    #allocation6 [shape = 's32[1]{0}', space=sflag, size = 0x4, scoped, tag = 'scoped memory for tpu_custom_call.1']
    #allocation7 [shape = 'u8[16384]{0}', space=vmem, size = 0x4000, scoped, tag = 'output window, operand 0']
    %7 = vsyncpa [#allocation3], 0
    %s8 = scalar_lea.sflag [#allocation3], 1
    %9 = vsyncpa %s8, 0
    %10 = vsyncpa [#allocation6], 0
    %11 = vsyncpa [#allocation4], 0
    %s12 = scalar_lea.sflag [#allocation4], 1
    %13 = vsyncpa %s12, 0
    loop: start=0, step=1, limit=4
    $region2: #{tpu_custom_call.1} parent=1 // loop_pre_header
      _
    $region3: #{tpu_custom_call.1} parent=1 // loop_header
      %s15 = sphi 0, %s19
      %p16 = scmp.ge.s32.totalorder %s15, 4
      %s25 = sphi 0, %s27
      %s28 = sphi 0, %s25
      %s29 = sphi 0, %s28
      %s45 = sphi 0, %s29
      %s49 = sphi 0, %s49
      %s51 = sphi 0, %s49
      %s52 = sphi 0, %s51
      %s66 = sphi 0, %s52
      %s72 = sphi 0, %s74
      %s75 = sphi 0, %s72
      %s76 = sphi 0, %s75
      %s92 = sphi 0, %s76
    $region4: #{tpu_custom_call.1} parent=1 // loop_header_branch
      %18 = sbr.rel (%p16) target = $region8
    $region5: #{tpu_custom_call.1} parent=1 // loop_body
      %s20 = ssub.s32 %s15, 1
      %s21 = ssub.s32 %s15, 2
      %s22 = sadd.s32 %s15, 1
      %s23 = ssub.s32 %s15, %s22
      %p24 = scmp.eq.s32.totalorder %s23, 0
      %s26 = sadd.s32 %s25, 1
      %s27 = scalar_select %p24, %s25, %s26
      %p30 = pneg %p24
      %p31 = scmp.eq.s32.totalorder %s15, 1
      %p32 = por %p30, %p31
      %p33 = scmp.ne.s32.totalorder %s25, %s28
      %p34 = scmp.eq.s32.totalorder %s15, 0
      %p35 = por %p33, %p34
      %p36 = scmp.ne.s32.totalorder %s25, %s28
      %p37 = scmp.eq.s32.totalorder %s20, 1
      %p38 = por %p36, %p37
      %p39 = scmp.ne.s32.totalorder %s28, %s29
      %p40 = scmp.eq.s32.totalorder %s20, 0
      %p41 = por %p39, %p40
      %p42 = scmp.ne.s32.totalorder %s28, %s29
      %p43 = scmp.eq.s32.totalorder %s21, 1
      %p44 = por %p42, %p43
      %p46 = scmp.ne.s32.totalorder %s29, %s45
      %p47 = scmp.eq.s32.totalorder %s21, 0
      %p48 = por %p46, %p47
      %s50 = sadd.s32 %s49, 1
      %p53 = scmp.eq.s32.totalorder %s15, 1
      %p54 = scmp.ne.s32.totalorder %s49, %s51
      %p55 = scmp.eq.s32.totalorder %s15, 0
      %p56 = por %p54, %p55
      %p57 = scmp.ne.s32.totalorder %s49, %s51
      %p58 = scmp.eq.s32.totalorder %s20, 1
      %p59 = por %p57, %p58
      %p60 = scmp.ne.s32.totalorder %s51, %s52
      %p61 = scmp.eq.s32.totalorder %s20, 0
      %p62 = por %p60, %p61
      %p63 = scmp.ne.s32.totalorder %s51, %s52
      %p64 = scmp.eq.s32.totalorder %s21, 1
      %p65 = por %p63, %p64
      %p67 = scmp.ne.s32.totalorder %s52, %s66
      %p68 = scmp.eq.s32.totalorder %s21, 0
      %p69 = por %p67, %p68
      %s70 = ssub.s32 %s15, %s22
      %p71 = scmp.eq.s32.totalorder %s70, 0
      %s73 = sadd.s32 %s72, 1
      %s74 = scalar_select %p71, %s72, %s73
      %p77 = pneg %p71
      %p78 = scmp.eq.s32.totalorder %s15, 1
      %p79 = por %p77, %p78
      %p80 = scmp.ne.s32.totalorder %s72, %s75
      %p81 = scmp.eq.s32.totalorder %s15, 0
      %p82 = por %p80, %p81
      %p83 = scmp.ne.s32.totalorder %s72, %s75
      %p84 = scmp.eq.s32.totalorder %s20, 1
      %p85 = por %p83, %p84
      %p86 = scmp.ne.s32.totalorder %s75, %s76
      %p87 = scmp.eq.s32.totalorder %s20, 0
      %p88 = por %p86, %p87
      %p89 = scmp.ne.s32.totalorder %s75, %s76
      %p90 = scmp.eq.s32.totalorder %s21, 1
      %p91 = por %p89, %p90
      %p93 = scmp.ne.s32.totalorder %s76, %s92
      %p94 = scmp.eq.s32.totalorder %s21, 0
      %p95 = por %p93, %p94
      %p96 = scmp.le.s32.totalorder 1, %s15
      %p97 = scmp.lt.s32.totalorder %s15, 3
      %p98 = pnand %p96, %p97
      %p99 = pneg %p98
      // Predicated region
      $region9: #{tpu_custom_call.1} parent=5 // pred_check
        _
      $region10: #{tpu_custom_call.1} parent=5 // pred_check_branch
        %101 = sbr.rel (%p98) target = $region12
      $region11: #{tpu_custom_call.1} parent=5 // pred_region
        %s102 = ssub.s32 %s15, 1
        // Predicated region
        $region13: #{tpu_custom_call.1} parent=11 // pred_check
          %p103 = pneg %p62
        $region14: #{tpu_custom_call.1} parent=11 // pred_check_branch
          %105 = sbr.rel (%p103) target = $region16
        $region15: #{tpu_custom_call.1} parent=11 // pred_region
          %107 = vsyncadd [#allocation6], 0
          %s109 = sshll.u32 %s1, 4
          %s110 = int_to_ptr.hbm [resolvable:$true] %s109
          %s111 = sshll.u32 [#allocation5], 4
          %s112 = int_to_ptr.vmem [resolvable:$true] %s111
          %114 = dma.hbm_to_vmem [thread:$0]  %s110, 128, %s112, [#allocation6]
        $region16: #{tpu_custom_call.1} parent=11 // pred_fallthru
          _
      $region12: #{tpu_custom_call.1} parent=5 // pred_fallthru
        _
      %p115 = scmp.lt.s32.totalorder %s15, 2
      // Predicated region
      $region17: #{tpu_custom_call.1} parent=5 // pred_check
        %p116 = pneg %p115
      $region18: #{tpu_custom_call.1} parent=5 // pred_check_branch
        %118 = sbr.rel (%p116) target = $region20
      $region19: #{tpu_custom_call.1} parent=5 // pred_region
        // Predicated region
        $region21: #{tpu_custom_call.1} parent=19 // pred_check
          %p119 = pneg %p35
        $region22: #{tpu_custom_call.1} parent=19 // pred_check_branch
          %121 = sbr.rel (%p119) target = $region24
        $region23: #{tpu_custom_call.1} parent=19 // pred_region
          %s122 = sand.u32 %s25, 1
          %s123 = scalar_lea.sflag [#allocation3], %s122
          %s124 = sand.u32 %s25, 1
          %s125 = smul.addr %s124, 8
          %s126 = scalar_lea.vmem [#allocation2], %s125
          %s127 = smul.u32 2, %s15
          %129 = vsyncadd %s123, 0
          %s130 = smul.addr %s127, 4
          %s131 = scalar_lea.hbm %s0, %s130
          %s132 = sshll.u32 %s131, 4
          %s133 = int_to_ptr.hbm [resolvable:$true] %s132
          %s134 = sshll.u32 %s126, 4
          %s135 = int_to_ptr.vmem [resolvable:$true] %s134
          %140 = dma.hbm_to_vmem [thread:$0]  %s133, 128, %s135, %s123, 64, 64, 4
        $region24: #{tpu_custom_call.1} parent=19 // pred_fallthru
          _
      $region20: #{tpu_custom_call.1} parent=5 // pred_fallthru
        _
      %p141 = scmp.le.s32.totalorder 1, %s15
      %p142 = scmp.lt.s32.totalorder %s15, 3
      %p143 = pnand %p141, %p142
      %p144 = pneg %p143
      // Predicated region
      $region25: #{tpu_custom_call.1} parent=5 // pred_check
        _
      $region26: #{tpu_custom_call.1} parent=5 // pred_check_branch
        %146 = sbr.rel (%p143) target = $region28
      $region27: #{tpu_custom_call.1} parent=5 // pred_region
        %s147 = ssub.s32 %s15, 1
        %s148 = sand.u32 %s28, 1
        %s149 = scalar_lea.sflag [#allocation3], %s148
        %s150 = sand.u32 %s28, 1
        %s151 = smul.addr %s150, 8
        %s152 = scalar_lea.vmem [#allocation2], %s151
        // Predicated region
        $region29: #{tpu_custom_call.1} parent=27 // pred_check
          %p153 = pneg %p41
        $region30: #{tpu_custom_call.1} parent=27 // pred_check_branch
          %155 = sbr.rel (%p153) target = $region32
        $region31: #{tpu_custom_call.1} parent=27 // pred_region
          %157 = dma.done %s149, 128
        $region32: #{tpu_custom_call.1} parent=27 // pred_fallthru
          _
        // Predicated region
        $region33: #{tpu_custom_call.1} parent=27 // pred_check
          %p158 = pneg %p62
        $region34: #{tpu_custom_call.1} parent=27 // pred_check_branch
          %160 = sbr.rel (%p158) target = $region36
        $region35: #{tpu_custom_call.1} parent=27 // pred_region
          %162 = dma.done [#allocation6], 128
        $region36: #{tpu_custom_call.1} parent=27 // pred_fallthru
          _
        %s163 = sand.u32 %s28, 1
        %s164 = scalar_lea.sflag [#allocation3], %s163
        %s165 = sand.u32 %s28, 1
        %s166 = smul.addr %s165, 8
        %s167 = scalar_lea.vmem [#allocation2], %s166
        %p168 = pneg %p41
        %p169 = pneg %p38
        %p170 = pneg %p62
        %p171 = pneg %p59
        %p172 = pneg %p88
        %p173 = pneg %p85
        %s174 = sand.u32 %s75, 1
        %s175 = scalar_lea.sflag [#allocation4], %s174
        %s176 = sand.u32 %s75, 1
        %s177 = smul.addr %s176, 16
        %s178 = scalar_lea.vmem [#allocation7], %s177
        %s179 = smul.u32 2, %s20
        %s180 = smul.u32 2, %s20
        %v181 = vld [vmem:[#allocation5] sm:$0xff]
        %v182 = vld [vmem:[%s152] sm:$0xf]
        %v184 = vrot.slane %v182, 4
        %185 = vrot.lane.b32.xlu0 %v184, 127
        %v186 = vpop.permute.xlu0 %185
        %188 = vrot.lane.b32.xlu0 %v182, 126
        %v189 = vpop.permute.xlu0 %188
        %191 = vrot.lane.b32.xlu0 %v184, 125
        %v192 = vpop.permute.xlu0 %191
        %194 = vrot.lane.b32.xlu0 %v182, 124
        %v195 = vpop.permute.xlu0 %194
        %vm196 = vcmask 1043456
        %v197 = vsel %vm196, %v182, %v186
        %v198 = vsel %vm196, %v189, %v192
        %vm199 = vcmask 162816
        %v201 = vsel %vm199, %v181, 0
        %v203 = vsel %vm196, %v195, 0
        %205 = vmatpush.msra.mxu0 0.0
        %206 = vmatpush.msra.mxu0 0.0
        %207 = vmatpush.msra.mxu0 0.0
        %208 = vmatpush.msra.mxu0 0.0
        %209 = vmatpush.msra.mxu0 0.0
        %210 = vmatpush.msra.mxu0 0.0
        %211 = vmatpush.msra.mxu0 0.0
        %212 = vmatpush.msra.mxu0 0.0
        %213 = vmatpush.msra.mxu0 0.0
        %214 = vmatpush.msra.mxu0 0.0
        %215 = vmatpush.msra.mxu0 0.0
        %216 = vmatpush.msra.mxu0 0.0
        %217 = vmatpush.msra.mxu0 0.0
        %218 = vmatpush.msra.mxu0 %v203
        %219 = vmatpush.msra.mxu0 %v198
        %220 = vmatpush.msra.mxu0 %v197
        %221 = vmatmul.f32.gmra.mxu0 %v201
        %v222 = vpop.f32.mrf.mxu0
        %v223 = vadd.f32 0.0, %v222
        %224 = vdwg.mxu0
        %vm225 = vcmask 130048
        %226 = vst.msk [vmem:[%s178] sm:$0xff] %vm225, %v223
        %s227 = scalar_lea.vmem %s152, 4 [#allocation2]
        %v228 = vld [vmem:[%s227] sm:$0xf]
        %v230 = vrot.slane %v228, 4
        %231 = vrot.lane.b32.xlu0 %v230, 127
        %v232 = vpop.permute.xlu0 %231
        %234 = vrot.lane.b32.xlu0 %v228, 126
        %v235 = vpop.permute.xlu0 %234
        %237 = vrot.lane.b32.xlu0 %v230, 125
        %v238 = vpop.permute.xlu0 %237
        %240 = vrot.lane.b32.xlu0 %v228, 124
        %v241 = vpop.permute.xlu0 %240
        %v242 = vsel %vm196, %v228, %v232
        %v243 = vsel %vm196, %v235, %v238
        %v244 = vsel %vm196, %v241, 0
        %246 = vmatpush.msra.mxu0 0.0
        %247 = vmatpush.msra.mxu0 0.0
        %248 = vmatpush.msra.mxu0 0.0
        %249 = vmatpush.msra.mxu0 0.0
        %250 = vmatpush.msra.mxu0 0.0
        %251 = vmatpush.msra.mxu0 0.0
        %252 = vmatpush.msra.mxu0 0.0
        %253 = vmatpush.msra.mxu0 0.0
        %254 = vmatpush.msra.mxu0 0.0
        %255 = vmatpush.msra.mxu0 0.0
        %256 = vmatpush.msra.mxu0 0.0
        %257 = vmatpush.msra.mxu0 0.0
        %258 = vmatpush.msra.mxu0 0.0
        %259 = vmatpush.msra.mxu0 %v244
        %260 = vmatpush.msra.mxu0 %v243
        %261 = vmatpush.msra.mxu0 %v242
        %262 = vmatmul.f32.gmra.mxu0 %v201
        %v263 = vpop.f32.mrf.mxu0
        %v264 = vadd.f32 0.0, %v263
        %265 = vdwg.mxu0
        %s266 = scalar_lea.vmem %s178, 8 [#allocation7]
        %267 = vst.msk [vmem:[%s266] sm:$0xff] %vm225, %v264
        %s268 = sand.u32 %s75, 1
        %s269 = scalar_lea.sflag [#allocation4], %s268
        %s270 = sand.u32 %s75, 1
        %s271 = smul.addr %s270, 16
        %s272 = scalar_lea.vmem [#allocation7], %s271
        // Predicated region
        $region37: #{tpu_custom_call.1} parent=27 // pred_check
          %p273 = pneg %p85
        $region38: #{tpu_custom_call.1} parent=27 // pred_check_branch
          %275 = sbr.rel (%p273) target = $region40
        $region39: #{tpu_custom_call.1} parent=27 // pred_region
          %s276 = smul.u32 2, %s20
          %278 = vsyncadd %s269, 0
          %s279 = smul.addr %s276, 8
          %s280 = scalar_lea.hbm %s2, %s279
          %s281 = sshll.u32 %s272, 4
          %s282 = int_to_ptr.vmem [resolvable:$true] %s281
          %s283 = sshll.u32 %s280, 4
          %s284 = int_to_ptr.hbm [resolvable:$true] %s283
          %289 = dma.vmem_to_hbm [thread:$0]  %s282, 256, %s284, %s269, 128, 128, 8
        $region40: #{tpu_custom_call.1} parent=27 // pred_fallthru
          _
      $region28: #{tpu_custom_call.1} parent=5 // pred_fallthru
        _
      %p290 = scmp.le.s32.totalorder 2, %s15
      // Predicated region
      $region41: #{tpu_custom_call.1} parent=5 // pred_check
        %p291 = pneg %p290
      $region42: #{tpu_custom_call.1} parent=5 // pred_check_branch
        %293 = sbr.rel (%p291) target = $region44
      $region43: #{tpu_custom_call.1} parent=5 // pred_region
        %s294 = ssub.s32 %s15, 2
        // Predicated region
        $region45: #{tpu_custom_call.1} parent=43 // pred_check
          %p295 = pneg %p91
        $region46: #{tpu_custom_call.1} parent=43 // pred_check_branch
          %297 = sbr.rel (%p295) target = $region48
        $region47: #{tpu_custom_call.1} parent=43 // pred_region
          %s298 = sand.u32 %s76, 1
          %s299 = scalar_lea.sflag [#allocation4], %s298
          %s300 = sand.u32 %s76, 1
          %s301 = smul.addr %s300, 16
          %s302 = scalar_lea.vmem [#allocation7], %s301
          %304 = dma.done %s299, 256
        $region48: #{tpu_custom_call.1} parent=43 // pred_fallthru
          _
      $region44: #{tpu_custom_call.1} parent=5 // pred_fallthru
        _
    $region6: #{tpu_custom_call.1} parent=1 // loop_footer
      %s19 = sadd.s32 1, %s15
    $region7: #{tpu_custom_call.1} parent=1 // loop_footer_branch
      %14 = sbr.rel target = $region3
    $region8: #{tpu_custom_call.1} parent=1 // loop_exit
      _
    %305 = vsyncpa [#allocation3], 1
    %s306 = scalar_lea.sflag [#allocation3], 1
    %307 = vsyncpa %s306, 1
    %308 = vsyncpa [#allocation6], 1
    %309 = vsyncpa [#allocation4], 1
    %s310 = scalar_lea.sflag [#allocation4], 1
    %311 = vsyncpa %s310, 1

</llo_original>
